<compile_context>
chip_gen: v7x
topology: tpu7x:2x2x1
jax: 0.10.0
libtpu: 0.0.40
codegen_flags: <defaults>
</compile_context>

<pallas_src>
import math

import jax
import jax.numpy as jnp
from jax.experimental import pallas as pl
from jax.experimental.pallas import tpu as pltpu

N_DIM = 2
N_POS_DIM = 2
N_HIDDEN = 256

BATCH_TILE = 1024   # default batch tile (multiple of 128; fits VMEM on v5e/v6e/v7x)
_LANE = 128         # lane-dense padded output width
_IN_PAD = 8         # padded [cos, sin, x, 0...] feature width

_GELU_C = 0.7978845608028654   # sqrt(2/pi)
_GELU_K = 0.044715


def _gelu_tanh(x):
    """tanh-approximate GELU.

    jnp.tanh lowers to the EUP transcendental unit (its own VLIW slot), so the
    nonlinearity no longer saturates the 4 VALU slots the way the erf rational
    polynomial did.  Pointwise deviation from exact erf-GELU is a few 1e-4.
    """
    inner = _GELU_C * (x + _GELU_K * (x * x) * x)
    return 0.5 * x * (1.0 + jnp.tanh(inner))


# ----------------------------------------------------------------------------
# Kernel: one batch tile of the Flow MLP.
# feat_ref already holds [cos(pi*temb), sin(pi*temb), x0, x1, 0, 0, 0, 0], so
# all four Linear layers are straight MXU matmuls with f32 accumulation.
# ----------------------------------------------------------------------------
def _flow_mlp_kernel(feat_ref, w1_ref, b1_ref, w2_ref, b2_ref,
                     w3_ref, b3_ref, w4_ref, out_ref):
    h = _gelu_tanh(jnp.dot(feat_ref[...], w1_ref[...],
                           preferred_element_type=jnp.float32) + b1_ref[...])
    h = _gelu_tanh(jnp.dot(h, w2_ref[...],
                           preferred_element_type=jnp.float32) + b2_ref[...])
    h = _gelu_tanh(jnp.dot(h, w3_ref[...],
                           preferred_element_type=jnp.float32) + b3_ref[...])
    # Lane-dense store: w4 is zero-padded to (256, 128) -> full-width unmasked
    # vst; the wrapper slices the result back to (B, n_dim).
    out_ref[...] = jnp.dot(h, w4_ref[...], preferred_element_type=jnp.float32)


# ----------------------------------------------------------------------------
# Wrapper
# ----------------------------------------------------------------------------
def _round_up(x, m):
    return ((x + m - 1) // m) * m


def _pick_tile(B, batch_tile):
    # Whole batch in one tile whenever it fits: amortizes all per-step overhead
    # and keeps the MXU M dimension as full as possible.
    if B <= batch_tile:
        return _round_up(B, 8)
    # Otherwise keep tiles as 128-multiples and target >=4 grid steps (>=2 per
    # v7x TensorCore) so each core can double-buffer input/output DMAs.
    n_steps = max(4, pl.cdiv(B, batch_tile))
    return max(128, min(batch_tile, _round_up(pl.cdiv(B, n_steps), 128)))


def flow_forward(t, x, params, *, batch_tile=BATCH_TILE):
    B, n_dim = x.shape
    # The kernel is specialized to the default Flow configuration; fail loudly.
    assert n_dim == N_DIM, "kernel is specialized to n_dim=2"
    assert t.shape == (B, 1), "t must be (B, 1)"
    assert params["wt"].shape == (1, 1) and params["bt"].shape == (1, 1), \
        "kernel is specialized to n_pos_dim=2 (scalar temb)"
    assert params["w1"].shape == (N_DIM + N_POS_DIM, N_HIDDEN)
    assert params["w2"].shape == (N_HIDDEN, N_HIDDEN)
    assert params["w3"].shape == (N_HIDDEN, N_HIDDEN)
    assert params["w4"].shape == (N_HIDDEN, N_DIM)

    tile = _pick_tile(B, batch_tile)
    B_pad = _round_up(B, tile)
    n_steps = B_pad // tile

    # Build the padded K=8 feature block on the wrapper side (fuses into the
    # pad/concat that already existed):  [cos(pi*temb), sin(pi*temb), x, 0...].
    # This removes the feat scratch + masked sub-lane stores from the kernel's
    # critical path into the first matmul.  O(B) elementwise work, negligible.
    t32 = t.astype(jnp.float32)
    x32 = x.astype(jnp.float32)
    temb = (t32 @ params["wt"] + params["bt"]) * jnp.float32(math.pi)   # (B, 1)
    feat = jnp.concatenate([jnp.cos(temb), jnp.sin(temb), x32], axis=-1)  # (B, 4)
    feat = jnp.pad(feat, ((0, B_pad - B), (0, _IN_PAD - (N_POS_DIM + n_dim))))

    # Zero-pad w1 rows to K=8 and w4 columns to 128 lanes.
    w1p = jnp.pad(params["w1"], ((0, _IN_PAD - (N_DIM + N_POS_DIM)), (0, 0)))
    w4p = jnp.pad(params["w4"], ((0, 0), (0, _LANE - N_DIM)))

    def row_spec(ncol):
        return pl.BlockSpec((tile, ncol), lambda i: (i, 0))

    def full_spec(arr):
        return pl.BlockSpec(arr.shape, lambda i: (0, 0))

    grid_spec = pltpu.PrefetchScalarGridSpec(
        num_scalar_prefetch=0,
        grid=(n_steps,),
        in_specs=[
            row_spec(_IN_PAD),                 # padded [cos, sin, x, 0...]
            full_spec(w1p), full_spec(params["b1"]),
            full_spec(params["w2"]), full_spec(params["b2"]),
            full_spec(params["w3"]), full_spec(params["b3"]),
            full_spec(w4p),
        ],
        out_specs=row_spec(_LANE),
    )

    # Advisory cost estimate so XLA schedules the surrounding ops sensibly.
    flops_per_row = 2 * (_IN_PAD * N_HIDDEN
                         + 2 * N_HIDDEN * N_HIDDEN
                         + N_HIDDEN * _LANE) + 3 * N_HIDDEN * 8
    weight_bytes = 4 * (_IN_PAD * N_HIDDEN + N_HIDDEN
                        + 2 * (N_HIDDEN * N_HIDDEN + N_HIDDEN)
                        + N_HIDDEN * _LANE)
    cost = pl.CostEstimate(
        flops=int(flops_per_row * B_pad),
        transcendentals=int(3 * N_HIDDEN * B_pad),
        bytes_accessed=int(weight_bytes + 4 * B_pad * (_IN_PAD + _LANE)),
    )

    out = pl.pallas_call(
        _flow_mlp_kernel,
        out_shape=jax.ShapeDtypeStruct((B_pad, _LANE), jnp.float32),
        grid_spec=grid_spec,
        compiler_params=pltpu.CompilerParams(
            dimension_semantics=("parallel",)),
        cost_estimate=cost,
    )(feat,
      w1p, params["b1"],
      params["w2"], params["b2"],
      params["w3"], params["b3"],
      w4p)
    return out[:B, :n_dim]


# ----------------------------------------------------------------------------
# Deterministic parameter init (mirrors nn.Linear's U(-1/sqrt(fan_in), ...)).
# Weights are stored as (in_features, out_features); biases as (1, out).
# ----------------------------------------------------------------------------
def init_flow_params(key, n_dim=N_DIM, n_pos_dim=N_POS_DIM, n_hidden=N_HIDDEN):
    def linear(k, fan_in, fan_out, bias=True):
        kw, kb = jax.random.split(k)
        bound = 1.0 / (fan_in ** 0.5)
        w = jax.random.uniform(kw, (fan_in, fan_out), jnp.float32, -bound, bound)
        b = (jax.random.uniform(kb, (1, fan_out), jnp.float32, -bound, bound)
             if bias else None)
        return w, b

    ks = jax.random.split(key, 5)
    wt, bt = linear(ks[0], 1, n_pos_dim // 2)
    w1, b1 = linear(ks[1], n_dim + n_pos_dim, n_hidden)
    w2, b2 = linear(ks[2], n_hidden, n_hidden)
    w3, b3 = linear(ks[3], n_hidden, n_hidden)
    w4, _ = linear(ks[4], n_hidden, n_dim, bias=False)
    return dict(wt=wt, bt=bt, w1=w1, b1=b1, w2=w2, b2=b2, w3=w3, b3=b3, w4=w4)


# Pure-JAX reference matching PyTorch semantics (exact erf-based GELU).
def flow_forward_ref(t, x, params):
    temb = (t @ params["wt"] + params["bt"]) * jnp.float32(math.pi)
    feat = jnp.concatenate([jnp.cos(temb), jnp.sin(temb), x], axis=-1)
    h = jax.nn.gelu(feat @ params["w1"] + params["b1"], approximate=False)
    h = jax.nn.gelu(h @ params["w2"] + params["b2"], approximate=False)
    h = jax.nn.gelu(h @ params["w3"] + params["b3"], approximate=False)
    return h @ params["w4"]


if __name__ == "__main__":
    key = jax.random.PRNGKey(0)
    kp, kt, kx = jax.random.split(key, 3)
    params = init_flow_params(kp)

    # Small check (single tile, tile shrunk to the batch).
    B = 16
    t = jax.random.uniform(kt, (B, 1), jnp.float32)
    x = jax.random.normal(kx, (B, N_DIM), jnp.float32)
    out = jax.block_until_ready(flow_forward(t, x, params))
    ref = flow_forward_ref(t, x, params)
    assert out.shape == (B, N_DIM) and out.dtype == jnp.float32
    if not bool(jnp.allclose(out, ref, atol=5e-3, rtol=5e-3)):
        raise AssertionError("Pallas kernel does not match JAX reference (B=16)")

    # Larger check (num_samples=1000 in the original script).  With the default
    # tile this is a single 1000-row step; we also force batch_tile=256 to
    # exercise the multi-step parallel grid + batch-padding path.
    B2 = 1000
    kt2, kx2 = jax.random.split(jax.random.PRNGKey(1))
    t2 = jax.random.uniform(kt2, (B2, 1), jnp.float32)
    x2 = jax.random.normal(kx2, (B2, N_DIM), jnp.float32)
    ref2 = flow_forward_ref(t2, x2, params)

    out2 = jax.block_until_ready(flow_forward(t2, x2, params))
    assert out2.shape == (B2, N_DIM)
    if not bool(jnp.allclose(out2, ref2, atol=5e-3, rtol=5e-3)):
        raise AssertionError("Pallas kernel does not match JAX reference (B=1000)")

    out3 = jax.block_until_ready(flow_forward(t2, x2, params, batch_tile=256))
    if not bool(jnp.allclose(out3, ref2, atol=5e-3, rtol=5e-3)):
        raise AssertionError("Pallas kernel does not match JAX reference "
                             "(B=1000, multi-step grid)")

    print("KERNEL_OK")
</pallas_src>

<mosaic_0001>
module attributes {stable_mosaic.version = 11 : i64} {
  func.func @_flow_mlp_kernel(%arg0: i32, %arg1: memref<16x8xf32, #tpu.memory_space<vmem>>, %arg2: memref<8x256xf32, #tpu.memory_space<vmem>>, %arg3: memref<1x256xf32, #tpu.memory_space<vmem>>, %arg4: memref<256x256xf32, #tpu.memory_space<vmem>>, %arg5: memref<1x256xf32, #tpu.memory_space<vmem>>, %arg6: memref<256x256xf32, #tpu.memory_space<vmem>>, %arg7: memref<1x256xf32, #tpu.memory_space<vmem>>, %arg8: memref<256x128xf32, #tpu.memory_space<vmem>>, %arg9: memref<16x128xf32, #tpu.memory_space<vmem>>) attributes {dimension_semantics = [#tpu.dimension_semantics<parallel>], iteration_bounds = array<i64: 1>, scalar_prefetch = 0 : i64, scratch_operands = 0 : i64, tpu.core_type = #tpu.core_type<tc>, window_params = [{transform_indices = @transform_0, window_bounds = array<i64: 16, 8>}, {pipeline_mode = #tpu.pipeline_mode<synchronous>, transform_indices = @transform_1, window_bounds = array<i64: 8, 256>}, {pipeline_mode = #tpu.pipeline_mode<synchronous>, transform_indices = @transform_2, window_bounds = array<i64: 1, 256>}, {pipeline_mode = #tpu.pipeline_mode<synchronous>, transform_indices = @transform_3, window_bounds = array<i64: 256, 256>}, {pipeline_mode = #tpu.pipeline_mode<synchronous>, transform_indices = @transform_4, window_bounds = array<i64: 1, 256>}, {pipeline_mode = #tpu.pipeline_mode<synchronous>, transform_indices = @transform_5, window_bounds = array<i64: 256, 256>}, {pipeline_mode = #tpu.pipeline_mode<synchronous>, transform_indices = @transform_6, window_bounds = array<i64: 1, 256>}, {pipeline_mode = #tpu.pipeline_mode<synchronous>, transform_indices = @transform_7, window_bounds = array<i64: 256, 128>}, {transform_indices = @transform_8, window_bounds = array<i64: 16, 128>}]} {
    %c0 = arith.constant 0 : index
    %c0_0 = arith.constant 0 : index
    %0 = vector.load %arg1[%c0, %c0_0] : memref<16x8xf32, #tpu.memory_space<vmem>>, vector<16x8xf32>
    %c0_1 = arith.constant 0 : index
    %c0_2 = arith.constant 0 : index
    %1 = vector.load %arg2[%c0_1, %c0_2] : memref<8x256xf32, #tpu.memory_space<vmem>>, vector<8x256xf32>
    %cst = arith.constant dense<0.000000e+00> : vector<16x256xf32>
    %2 = tpu.matmul %0, %1, %cst {dimension_numbers = #tpu.dot_dimension_numbers<[1], [0], [0], [1], [0, 0, 1, 1], [], []>} : vector<16x8xf32>, vector<8x256xf32>, vector<16x256xf32> -> vector<16x256xf32>
    %c0_3 = arith.constant 0 : index
    %c0_4 = arith.constant 0 : index
    %3 = vector.load %arg3[%c0_3, %c0_4] : memref<1x256xf32, #tpu.memory_space<vmem>>, vector<1x256xf32>
    %4 = vector.broadcast %3 : vector<1x256xf32> to vector<16x256xf32>
    %5 = arith.addf %2, %4 : vector<16x256xf32>
    %6 = arith.mulf %5, %5 : vector<16x256xf32>
    %cst_5 = arith.constant 4.471500e-02 : f32
    %7 = vector.broadcast %cst_5 : f32 to vector<16x256xf32>
    %8 = arith.mulf %7, %6 : vector<16x256xf32>
    %9 = arith.mulf %8, %5 : vector<16x256xf32>
    %10 = arith.addf %5, %9 : vector<16x256xf32>
    %cst_6 = arith.constant 0.797884583 : f32
    %11 = vector.broadcast %cst_6 : f32 to vector<16x256xf32>
    %12 = arith.mulf %11, %10 : vector<16x256xf32>
    %cst_7 = arith.constant 5.000000e-01 : f32
    %13 = vector.broadcast %cst_7 : f32 to vector<16x256xf32>
    %14 = arith.mulf %13, %5 : vector<16x256xf32>
    %15 = math.tanh %12 : vector<16x256xf32>
    %cst_8 = arith.constant 1.000000e+00 : f32
    %16 = vector.broadcast %cst_8 : f32 to vector<16x256xf32>
    %17 = arith.addf %16, %15 : vector<16x256xf32>
    %18 = arith.mulf %14, %17 : vector<16x256xf32>
    %c0_9 = arith.constant 0 : index
    %c0_10 = arith.constant 0 : index
    %19 = vector.load %arg4[%c0_9, %c0_10] : memref<256x256xf32, #tpu.memory_space<vmem>>, vector<256x256xf32>
    %cst_11 = arith.constant dense<0.000000e+00> : vector<16x256xf32>
    %20 = tpu.matmul %18, %19, %cst_11 {dimension_numbers = #tpu.dot_dimension_numbers<[1], [0], [0], [1], [0, 0, 1, 1], [], []>} : vector<16x256xf32>, vector<256x256xf32>, vector<16x256xf32> -> vector<16x256xf32>
    %c0_12 = arith.constant 0 : index
    %c0_13 = arith.constant 0 : index
    %21 = vector.load %arg5[%c0_12, %c0_13] : memref<1x256xf32, #tpu.memory_space<vmem>>, vector<1x256xf32>
    %22 = vector.broadcast %21 : vector<1x256xf32> to vector<16x256xf32>
    %23 = arith.addf %20, %22 : vector<16x256xf32>
    %24 = arith.mulf %23, %23 : vector<16x256xf32>
    %cst_14 = arith.constant 4.471500e-02 : f32
    %25 = vector.broadcast %cst_14 : f32 to vector<16x256xf32>
    %26 = arith.mulf %25, %24 : vector<16x256xf32>
    %27 = arith.mulf %26, %23 : vector<16x256xf32>
    %28 = arith.addf %23, %27 : vector<16x256xf32>
    %cst_15 = arith.constant 0.797884583 : f32
    %29 = vector.broadcast %cst_15 : f32 to vector<16x256xf32>
    %30 = arith.mulf %29, %28 : vector<16x256xf32>
    %cst_16 = arith.constant 5.000000e-01 : f32
    %31 = vector.broadcast %cst_16 : f32 to vector<16x256xf32>
    %32 = arith.mulf %31, %23 : vector<16x256xf32>
    %33 = math.tanh %30 : vector<16x256xf32>
    %cst_17 = arith.constant 1.000000e+00 : f32
    %34 = vector.broadcast %cst_17 : f32 to vector<16x256xf32>
    %35 = arith.addf %34, %33 : vector<16x256xf32>
    %36 = arith.mulf %32, %35 : vector<16x256xf32>
    %c0_18 = arith.constant 0 : index
    %c0_19 = arith.constant 0 : index
    %37 = vector.load %arg6[%c0_18, %c0_19] : memref<256x256xf32, #tpu.memory_space<vmem>>, vector<256x256xf32>
    %cst_20 = arith.constant dense<0.000000e+00> : vector<16x256xf32>
    %38 = tpu.matmul %36, %37, %cst_20 {dimension_numbers = #tpu.dot_dimension_numbers<[1], [0], [0], [1], [0, 0, 1, 1], [], []>} : vector<16x256xf32>, vector<256x256xf32>, vector<16x256xf32> -> vector<16x256xf32>
    %c0_21 = arith.constant 0 : index
    %c0_22 = arith.constant 0 : index
    %39 = vector.load %arg7[%c0_21, %c0_22] : memref<1x256xf32, #tpu.memory_space<vmem>>, vector<1x256xf32>
    %40 = vector.broadcast %39 : vector<1x256xf32> to vector<16x256xf32>
    %41 = arith.addf %38, %40 : vector<16x256xf32>
    %42 = arith.mulf %41, %41 : vector<16x256xf32>
    %cst_23 = arith.constant 4.471500e-02 : f32
    %43 = vector.broadcast %cst_23 : f32 to vector<16x256xf32>
    %44 = arith.mulf %43, %42 : vector<16x256xf32>
    %45 = arith.mulf %44, %41 : vector<16x256xf32>
    %46 = arith.addf %41, %45 : vector<16x256xf32>
    %cst_24 = arith.constant 0.797884583 : f32
    %47 = vector.broadcast %cst_24 : f32 to vector<16x256xf32>
    %48 = arith.mulf %47, %46 : vector<16x256xf32>
    %cst_25 = arith.constant 5.000000e-01 : f32
    %49 = vector.broadcast %cst_25 : f32 to vector<16x256xf32>
    %50 = arith.mulf %49, %41 : vector<16x256xf32>
    %51 = math.tanh %48 : vector<16x256xf32>
    %cst_26 = arith.constant 1.000000e+00 : f32
    %52 = vector.broadcast %cst_26 : f32 to vector<16x256xf32>
    %53 = arith.addf %52, %51 : vector<16x256xf32>
    %54 = arith.mulf %50, %53 : vector<16x256xf32>
    %c0_27 = arith.constant 0 : index
    %c0_28 = arith.constant 0 : index
    %55 = vector.load %arg8[%c0_27, %c0_28] : memref<256x128xf32, #tpu.memory_space<vmem>>, vector<256x128xf32>
    %cst_29 = arith.constant dense<0.000000e+00> : vector<16x128xf32>
    %56 = tpu.matmul %54, %55, %cst_29 {dimension_numbers = #tpu.dot_dimension_numbers<[1], [0], [0], [1], [0, 0, 1, 1], [], []>} : vector<16x256xf32>, vector<256x128xf32>, vector<16x128xf32> -> vector<16x128xf32>
    %c0_30 = arith.constant 0 : index
    %c0_31 = arith.constant 0 : index
    %57 = vector.load %arg9[%c0_30, %c0_31] : memref<16x128xf32, #tpu.memory_space<vmem>>, vector<16x128xf32>
    tpu.vector_store %arg9[%c0_30, %c0_31], %56 {strides = array<i32>} : memref<16x128xf32, #tpu.memory_space<vmem>>, vector<16x128xf32>,
    return
  }
  func.func @transform_0(%arg0: i32) -> (i32, i32) {
    %c0_i32 = arith.constant 0 : i32
    %c0_i32_0 = arith.constant 0 : i32
    return %arg0, %c0_i32 : i32, i32
  }
  func.func @transform_1(%arg0: i32) -> (i32, i32) {
    %c0_i32 = arith.constant 0 : i32
    %c0_i32_0 = arith.constant 0 : i32
    %c0_i32_1 = arith.constant 0 : i32
    return %c0_i32, %c0_i32_0 : i32, i32
  }
  func.func @transform_2(%arg0: i32) -> (i32, i32) {
    %c0_i32 = arith.constant 0 : i32
    %c0_i32_0 = arith.constant 0 : i32
    %c0_i32_1 = arith.constant 0 : i32
    return %c0_i32, %c0_i32_0 : i32, i32
  }
  func.func @transform_3(%arg0: i32) -> (i32, i32) {
    %c0_i32 = arith.constant 0 : i32
    %c0_i32_0 = arith.constant 0 : i32
    %c0_i32_1 = arith.constant 0 : i32
    return %c0_i32, %c0_i32_0 : i32, i32
  }
  func.func @transform_4(%arg0: i32) -> (i32, i32) {
    %c0_i32 = arith.constant 0 : i32
    %c0_i32_0 = arith.constant 0 : i32
    %c0_i32_1 = arith.constant 0 : i32
    return %c0_i32, %c0_i32_0 : i32, i32
  }
  func.func @transform_5(%arg0: i32) -> (i32, i32) {
    %c0_i32 = arith.constant 0 : i32
    %c0_i32_0 = arith.constant 0 : i32
    %c0_i32_1 = arith.constant 0 : i32
    return %c0_i32, %c0_i32_0 : i32, i32
  }
  func.func @transform_6(%arg0: i32) -> (i32, i32) {
    %c0_i32 = arith.constant 0 : i32
    %c0_i32_0 = arith.constant 0 : i32
    %c0_i32_1 = arith.constant 0 : i32
    return %c0_i32, %c0_i32_0 : i32, i32
  }
  func.func @transform_7(%arg0: i32) -> (i32, i32) {
    %c0_i32 = arith.constant 0 : i32
    %c0_i32_0 = arith.constant 0 : i32
    %c0_i32_1 = arith.constant 0 : i32
    return %c0_i32, %c0_i32_0 : i32, i32
  }
  func.func @transform_8(%arg0: i32) -> (i32, i32) {
    %c0_i32 = arith.constant 0 : i32
    %c0_i32_0 = arith.constant 0 : i32
    return %arg0, %c0_i32 : i32, i32
  }
}

</mosaic_0001>

<llo_original>
// kernel: tpu_custom_call.1
$region0: #{tpu_custom_call.1}
  #allocation0 [shape = 'u32[]', space=smem, size = 0x4, offset = 0x4, fixed_abs, tag = 'smem constant byte address 0x4 - core index']
  #allocation1 [shape = 'u32[144,128]{1,0:T(1,128)}', space=vmem, size = 0x12000, scoped, tag = 'internal scratch']
  %s0 = inlined_call_operand.vmem [shape: f32[16,8], index: 0, kind: input, shape index: {}]
  %s1 = inlined_call_operand.vmem [shape: f32[8,256], index: 1, kind: input, shape index: {}]
  %s2 = inlined_call_operand.vmem [shape: f32[1,256], index: 2, kind: input, shape index: {}]
  %s3 = inlined_call_operand.hbm [shape: f32[256,256], index: 3, kind: input, shape index: {}]
  %s4 = inlined_call_operand.vmem [shape: f32[1,256], index: 4, kind: input, shape index: {}]
  %s5 = inlined_call_operand.hbm [shape: f32[256,256], index: 5, kind: input, shape index: {}]
  %s6 = inlined_call_operand.vmem [shape: f32[1,256], index: 6, kind: input, shape index: {}]
  %s7 = inlined_call_operand.hbm [shape: f32[256,128], index: 7, kind: input, shape index: {}]
  %s8 = inlined_call_operand.hbm [shape: f32[16,128], index: 8, kind: output, shape index: {}]
  %s9 = sld [smem:[#allocation0]]
  $region54: #{tpu_custom_call.1} parent=0
    _
  %s11 = ssub.s32 1, %s9
  %s12 = scalar_select 0, %s11, %s9
  $region1: #{tpu_custom_call.1} parent=0
    #allocation2 [shape = 'u8[262144]{0}', space=vmem, size = 0x40000, scoped, tag = 'input window, operand 3, single buffered']
    #allocation3 [shape = 's32[1]{0}', space=sflag, size = 0x4, scoped, tag = 'scoped memory for tpu_custom_call.1']
    #allocation4 [shape = 's32[1]{0}', space=sflag, size = 0x4, scoped, tag = 'scoped memory for tpu_custom_call.1']
    #allocation5 [shape = 'u8[262144]{0}', space=vmem, size = 0x40000, scoped, tag = 'input window, operand 5, single buffered']
    #allocation6 [shape = 's32[1]{0}', space=sflag, size = 0x4, scoped, tag = 'scoped memory for tpu_custom_call.1']
    #allocation7 [shape = 'u8[131072]{0}', space=vmem, size = 0x20000, scoped, tag = 'input window, operand 7, single buffered']
    #allocation8 [shape = 'u8[8192]{0}', space=vmem, size = 0x2000, scoped, tag = 'output window, operand 0, single buffered']
    %13 = vsyncpa [#allocation3], 0
    %14 = vsyncpa [#allocation6], 0
    %15 = vsyncpa [#allocation4], 0
    // Predicated region
    $region2: #{tpu_custom_call.1} parent=1 // pred_check
      _
    $region3: #{tpu_custom_call.1} parent=1 // pred_check_branch
      %17 = sbr.rel (0) target = $region5
    $region4: #{tpu_custom_call.1} parent=1 // pred_region
      _
    $region5: #{tpu_custom_call.1} parent=1 // pred_fallthru
      _
    // Predicated region
    $region6: #{tpu_custom_call.1} parent=1 // pred_check
      _
    $region7: #{tpu_custom_call.1} parent=1 // pred_check_branch
      %19 = sbr.rel (0) target = $region9
    $region8: #{tpu_custom_call.1} parent=1 // pred_region
      _
    $region9: #{tpu_custom_call.1} parent=1 // pred_fallthru
      _
    // Predicated region
    $region10: #{tpu_custom_call.1} parent=1 // pred_check
      _
    $region11: #{tpu_custom_call.1} parent=1 // pred_check_branch
      %21 = sbr.rel (0) target = $region13
    $region12: #{tpu_custom_call.1} parent=1 // pred_region
      _
    $region13: #{tpu_custom_call.1} parent=1 // pred_fallthru
      _
    // Predicated region
    $region14: #{tpu_custom_call.1} parent=1 // pred_check
      _
    $region15: #{tpu_custom_call.1} parent=1 // pred_check_branch
      %23 = sbr.rel (0) target = $region17
    $region16: #{tpu_custom_call.1} parent=1 // pred_region
      %s25 = ssub.s32 8192, 8192
      %26 = vsyncadd [#allocation3], %s25
      %s27 = sshll.u32 [#allocation2], 4
      %s28 = int_to_ptr.vmem [resolvable:$true] %s27
      %33 = dma.hbm_to_vmem [thread:$0]  %s3, 8192, %s28, [#allocation3], 256, 256, 16
    $region17: #{tpu_custom_call.1} parent=1 // pred_fallthru
      _
    // Predicated region
    $region18: #{tpu_custom_call.1} parent=1 // pred_check
      _
    $region19: #{tpu_custom_call.1} parent=1 // pred_check_branch
      %35 = sbr.rel (0) target = $region21
    $region20: #{tpu_custom_call.1} parent=1 // pred_region
      _
    $region21: #{tpu_custom_call.1} parent=1 // pred_fallthru
      _
    // Predicated region
    $region22: #{tpu_custom_call.1} parent=1 // pred_check
      _
    $region23: #{tpu_custom_call.1} parent=1 // pred_check_branch
      %37 = sbr.rel (0) target = $region25
    $region24: #{tpu_custom_call.1} parent=1 // pred_region
      %s39 = ssub.s32 8192, 8192
      %40 = vsyncadd [#allocation6], %s39
      %s41 = sshll.u32 [#allocation5], 4
      %s42 = int_to_ptr.vmem [resolvable:$true] %s41
      %47 = dma.hbm_to_vmem [thread:$0]  %s5, 8192, %s42, [#allocation6], 256, 256, 16
    $region25: #{tpu_custom_call.1} parent=1 // pred_fallthru
      _
    // Predicated region
    $region26: #{tpu_custom_call.1} parent=1 // pred_check
      _
    $region27: #{tpu_custom_call.1} parent=1 // pred_check_branch
      %49 = sbr.rel (0) target = $region29
    $region28: #{tpu_custom_call.1} parent=1 // pred_region
      _
    $region29: #{tpu_custom_call.1} parent=1 // pred_fallthru
      _
    // Predicated region
    $region30: #{tpu_custom_call.1} parent=1 // pred_check
      _
    $region31: #{tpu_custom_call.1} parent=1 // pred_check_branch
      %51 = sbr.rel (0) target = $region33
    $region32: #{tpu_custom_call.1} parent=1 // pred_region
      %s53 = ssub.s32 4096, 4096
      %54 = vsyncadd [#allocation6], %s53
      %s55 = sshll.u32 [#allocation7], 4
      %s56 = int_to_ptr.vmem [resolvable:$true] %s55
      %61 = dma.hbm_to_vmem [thread:$0]  %s7, 4096, %s56, [#allocation6], 128, 128, 8
    $region33: #{tpu_custom_call.1} parent=1 // pred_fallthru
      _
    // Predicated region
    $region34: #{tpu_custom_call.1} parent=1 // pred_check
      _
    $region35: #{tpu_custom_call.1} parent=1 // pred_check_branch
      %63 = sbr.rel (0) target = $region37
    $region36: #{tpu_custom_call.1} parent=1 // pred_region
      %64 = dma.done [#allocation3], 8192
    $region37: #{tpu_custom_call.1} parent=1 // pred_fallthru
      _
    // Predicated region
    $region38: #{tpu_custom_call.1} parent=1 // pred_check
      _
    $region39: #{tpu_custom_call.1} parent=1 // pred_check_branch
      %66 = sbr.rel (0) target = $region41
    $region40: #{tpu_custom_call.1} parent=1 // pred_region
      %67 = dma.done [#allocation6], 8192
    $region41: #{tpu_custom_call.1} parent=1 // pred_fallthru
      _
    // Predicated region
    $region42: #{tpu_custom_call.1} parent=1 // pred_check
      _
    $region43: #{tpu_custom_call.1} parent=1 // pred_check_branch
      %69 = sbr.rel (0) target = $region45
    $region44: #{tpu_custom_call.1} parent=1 // pred_region
      %70 = dma.done [#allocation6], 4096
    $region45: #{tpu_custom_call.1} parent=1 // pred_fallthru
      _
    %v71 = vld [vmem:[%s0] sm:$0xff]
    %v72 = vld [vmem:[%s0 + $0x8] sm:$0xff]
    %v73 = vld [vmem:[%s1] sm:$0xff]
    %v74 = vld [vmem:[%s1 + $0x8] sm:$0xff]
    %v75 = vld [vmem:[%s2] sm:$0x3]
    %v77 = vlaneseq
    %v78 = vshrl.u32 %v77, 7
    %v79 = vsub.s32 0, %v78
    %v80 = vrot.slane %v75, %v79
    %v81 = vlaneseq
    %v82 = vshrl.u32 %v81, 7
    %v83 = vsub.s32 1, %v82
    %v84 = vrot.slane %v75, %v83
    %vm87 = vcmask 64512
    %v89 = vsel %vm87, %v71, 0
    %v92 = vsel %vm87, %v72, 0
    %94 = vmatprep.subr.mxu0 %v74
    %95 = vmatpush1.msra.mxu0 %v73
    %96 = vmatprep.subr.mxu0 0.0
    %97 = vmatpush1.msra.mxu0 0.0
    %98 = vmatprep.subr.mxu0 0.0
    %99 = vmatpush1.msra.mxu0 0.0
    %100 = vmatprep.subr.mxu0 0.0
    %101 = vmatpush1.msra.mxu0 0.0
    %102 = vmatprep.subr.mxu0 0.0
    %103 = vmatpush1.msra.mxu0 0.0
    %104 = vmatprep.subr.mxu0 0.0
    %105 = vmatpush1.msra.mxu0 0.0
    %106 = vmatprep.subr.mxu0 0.0
    %107 = vmatpush1.msra.mxu0 0.0
    %108 = vmatprep.subr.mxu0 0.0
    %109 = vmatpush1.msra.mxu0 0.0
    %110 = vmatprep.subr.mxu0 0.0
    %111 = vmatpush1.msra.mxu0 0.0
    %112 = vmatprep.subr.mxu0 0.0
    %113 = vmatpush1.msra.mxu0 0.0
    %114 = vmatprep.subr.mxu0 0.0
    %115 = vmatpush1.msra.mxu0 0.0
    %116 = vmatprep.subr.mxu0 0.0
    %117 = vmatpush1.msra.mxu0 0.0
    %118 = vmatprep.subr.mxu0 0.0
    %119 = vmatpush1.msra.mxu0 0.0
    %120 = vmatprep.subr.mxu0 0.0
    %121 = vmatpush1.msra.mxu0 0.0
    %122 = vmatprep.subr.mxu0 0.0
    %123 = vmatpush1.msra.mxu0 0.0
    %124 = vmatprep.subr.mxu0 0.0
    %125 = vmatpush1.msra.mxu0 0.0
    %126 = vmatprep.subr.mxu0 0.0
    %127 = vmatpush1.msra.mxu0 0.0
    %128 = vmatprep.subr.mxu0 0.0
    %129 = vmatpush1.msra.mxu0 0.0
    %130 = vmatprep.subr.mxu0 0.0
    %131 = vmatpush1.msra.mxu0 0.0
    %132 = vmatprep.subr.mxu0 0.0
    %133 = vmatpush1.msra.mxu0 0.0
    %134 = vmatprep.subr.mxu0 0.0
    %135 = vmatpush1.msra.mxu0 0.0
    %136 = vmatprep.subr.mxu0 0.0
    %137 = vmatpush1.msra.mxu0 0.0
    %138 = vmatprep.subr.mxu0 0.0
    %139 = vmatpush1.msra.mxu0 0.0
    %140 = vmatprep.subr.mxu0 0.0
    %141 = vmatpush1.msra.mxu0 0.0
    %142 = vmatprep.subr.mxu0 0.0
    %143 = vmatpush1.msra.mxu0 0.0
    %144 = vmatprep.subr.mxu0 0.0
    %145 = vmatpush1.msra.mxu0 0.0
    %146 = vmatprep.subr.mxu0 0.0
    %147 = vmatpush1.msra.mxu0 0.0
    %148 = vmatprep.subr.mxu0 0.0
    %149 = vmatpush1.msra.mxu0 0.0
    %150 = vmatprep.subr.mxu0 0.0
    %151 = vmatpush1.msra.mxu0 0.0
    %152 = vmatprep.subr.mxu0 0.0
    %153 = vmatpush1.msra.mxu0 0.0
    %154 = vmatprep.subr.mxu0 0.0
    %155 = vmatpush1.msra.mxu0 0.0
    %156 = vmatprep.subr.mxu0 0.0
    %157 = vmatpush1.msra.mxu0 0.0
    %158 = vmatprep.mubr.f32.mxu0 0.0
    %159 = vmatmul.mubr.f32.gmra.mrb[0].mxu0 %v89
    %v160 = vpop.f32.mrb[0].mxu0
    %v161 = vadd.f32 %v80, %v160
    %v162 = vpop.f32.mrb[0].mxu0
    %v163 = vadd.f32 %v84, %v162
    %164 = vmatprep.mubr.f32.mxu0 0.0
    %165 = vmatmul.mubr.f32.gmra.mrb[0].mxu0 %v92
    %v166 = vpop.f32.mrb[0].mxu0
    %v167 = vadd.f32 %v80, %v166
    %v168 = vpop.f32.mrb[0].mxu0
    %v169 = vadd.f32 %v84, %v168
    %170 = vdwg.mxu0
    %v171 = vmul.f32 %v161, %v161
    %v172 = vmul.f32 %v163, %v163
    %v173 = vmul.f32 %v167, %v167
    %v174 = vmul.f32 %v169, %v169
    %v175 = vmul.f32 %v171, 0.044715
    %v176 = vmul.f32 %v172, 0.044715
    %v177 = vmul.f32 %v173, 0.044715
    %v178 = vmul.f32 %v174, 0.044715
    %v179 = vmul.f32 %v175, %v161
    %v180 = vmul.f32 %v176, %v163
    %v181 = vmul.f32 %v177, %v167
    %v182 = vmul.f32 %v178, %v169
    %v183 = vadd.f32 %v161, %v179
    %v184 = vadd.f32 %v163, %v180
    %v185 = vadd.f32 %v167, %v181
    %v186 = vadd.f32 %v169, %v182
    %v187 = vmul.f32 %v183, 0.7978846
    %v188 = vmul.f32 %v184, 0.7978846
    %v189 = vmul.f32 %v185, 0.7978846
    %v190 = vmul.f32 %v186, 0.7978846
    %v191 = vmul.f32 %v161, 0.5
    %v192 = vmul.f32 %v163, 0.5
    %v193 = vmul.f32 %v167, 0.5
    %v194 = vmul.f32 %v169, 0.5
    %v195 = vtanh.pop %v187
    %v196 = vtanh.pop %v188
    %v197 = vtanh.pop %v189
    %v198 = vtanh.pop %v190
    %v199 = vadd.f32 %v195, 1.0
    %v200 = vadd.f32 %v196, 1.0
    %v201 = vadd.f32 %v197, 1.0
    %v202 = vadd.f32 %v198, 1.0
    %v203 = vmul.f32 %v191, %v199
    %v204 = vmul.f32 %v192, %v200
    %v205 = vmul.f32 %v193, %v201
    %v206 = vmul.f32 %v194, %v202
    %v207 = vld [vmem:[#allocation2] sm:$0xff]
    %v208 = vld [vmem:[#allocation2 + $0x8] sm:$0xff]
    %v209 = vld [vmem:[#allocation2 + $0x10] sm:$0xff]
    %v210 = vld [vmem:[#allocation2 + $0x18] sm:$0xff]
    %v211 = vld [vmem:[#allocation2 + $0x20] sm:$0xff]
    %v212 = vld [vmem:[#allocation2 + $0x28] sm:$0xff]
    %v213 = vld [vmem:[#allocation2 + $0x30] sm:$0xff]
    %v214 = vld [vmem:[#allocation2 + $0x38] sm:$0xff]
    %v215 = vld [vmem:[#allocation2 + $0x40] sm:$0xff]
    %v216 = vld [vmem:[#allocation2 + $0x48] sm:$0xff]
    %v217 = vld [vmem:[#allocation2 + $0x50] sm:$0xff]
    %v218 = vld [vmem:[#allocation2 + $0x58] sm:$0xff]
    %v219 = vld [vmem:[#allocation2 + $0x60] sm:$0xff]
    %v220 = vld [vmem:[#allocation2 + $0x68] sm:$0xff]
    %v221 = vld [vmem:[#allocation2 + $0x70] sm:$0xff]
    %v222 = vld [vmem:[#allocation2 + $0x78] sm:$0xff]
    %v223 = vld [vmem:[#allocation2 + $0x80] sm:$0xff]
    %v224 = vld [vmem:[#allocation2 + $0x88] sm:$0xff]
    %v225 = vld [vmem:[#allocation2 + $0x90] sm:$0xff]
    %v226 = vld [vmem:[#allocation2 + $0x98] sm:$0xff]
    %v227 = vld [vmem:[#allocation2 + $0xa0] sm:$0xff]
    %v228 = vld [vmem:[#allocation2 + $0xa8] sm:$0xff]
    %v229 = vld [vmem:[#allocation2 + $0xb0] sm:$0xff]
    %v230 = vld [vmem:[#allocation2 + $0xb8] sm:$0xff]
    %v231 = vld [vmem:[#allocation2 + $0xc0] sm:$0xff]
    %v232 = vld [vmem:[#allocation2 + $0xc8] sm:$0xff]
    %v233 = vld [vmem:[#allocation2 + $0xd0] sm:$0xff]
    %v234 = vld [vmem:[#allocation2 + $0xd8] sm:$0xff]
    %v235 = vld [vmem:[#allocation2 + $0xe0] sm:$0xff]
    %v236 = vld [vmem:[#allocation2 + $0xe8] sm:$0xff]
    %v237 = vld [vmem:[#allocation2 + $0xf0] sm:$0xff]
    %v238 = vld [vmem:[#allocation2 + $0xf8] sm:$0xff]
    %v239 = vld [vmem:[#allocation2 + $0x100] sm:$0xff]
    %v240 = vld [vmem:[#allocation2 + $0x108] sm:$0xff]
    %v241 = vld [vmem:[#allocation2 + $0x110] sm:$0xff]
    %v242 = vld [vmem:[#allocation2 + $0x118] sm:$0xff]
    %v243 = vld [vmem:[#allocation2 + $0x120] sm:$0xff]
    %v244 = vld [vmem:[#allocation2 + $0x128] sm:$0xff]
    %v245 = vld [vmem:[#allocation2 + $0x130] sm:$0xff]
    %v246 = vld [vmem:[#allocation2 + $0x138] sm:$0xff]
    %v247 = vld [vmem:[#allocation2 + $0x140] sm:$0xff]
    %v248 = vld [vmem:[#allocation2 + $0x148] sm:$0xff]
    %v249 = vld [vmem:[#allocation2 + $0x150] sm:$0xff]
    %v250 = vld [vmem:[#allocation2 + $0x158] sm:$0xff]
    %v251 = vld [vmem:[#allocation2 + $0x160] sm:$0xff]
    %v252 = vld [vmem:[#allocation2 + $0x168] sm:$0xff]
    %v253 = vld [vmem:[#allocation2 + $0x170] sm:$0xff]
    %v254 = vld [vmem:[#allocation2 + $0x178] sm:$0xff]
    %v255 = vld [vmem:[#allocation2 + $0x180] sm:$0xff]
    %v256 = vld [vmem:[#allocation2 + $0x188] sm:$0xff]
    %v257 = vld [vmem:[#allocation2 + $0x190] sm:$0xff]
    %v258 = vld [vmem:[#allocation2 + $0x198] sm:$0xff]
    %v259 = vld [vmem:[#allocation2 + $0x1a0] sm:$0xff]
    %v260 = vld [vmem:[#allocation2 + $0x1a8] sm:$0xff]
    %v261 = vld [vmem:[#allocation2 + $0x1b0] sm:$0xff]
    %v262 = vld [vmem:[#allocation2 + $0x1b8] sm:$0xff]
    %v263 = vld [vmem:[#allocation2 + $0x1c0] sm:$0xff]
    %v264 = vld [vmem:[#allocation2 + $0x1c8] sm:$0xff]
    %v265 = vld [vmem:[#allocation2 + $0x1d0] sm:$0xff]
    %v266 = vld [vmem:[#allocation2 + $0x1d8] sm:$0xff]
    %v267 = vld [vmem:[#allocation2 + $0x1e0] sm:$0xff]
    %v268 = vld [vmem:[#allocation2 + $0x1e8] sm:$0xff]
    %v269 = vld [vmem:[#allocation2 + $0x1f0] sm:$0xff]
    %v270 = vld [vmem:[#allocation2 + $0x1f8] sm:$0xff]
    %v271 = vld [vmem:[%s4] sm:$0x3]
    %v273 = vlaneseq
    %v274 = vshrl.u32 %v273, 7
    %v275 = vsub.s32 0, %v274
    %v276 = vrot.slane %v271, %v275
    %v277 = vlaneseq
    %v278 = vshrl.u32 %v277, 7
    %v279 = vsub.s32 1, %v278
    %v280 = vrot.slane %v271, %v279
    %283 = vmatprep.subr.mxu0 %v208
    %284 = vmatpush1.msra.mxu0 %v207
    %285 = vmatprep.subr.mxu0 %v210
    %286 = vmatpush1.msra.mxu0 %v209
    %287 = vmatprep.subr.mxu0 %v212
    %288 = vmatpush1.msra.mxu0 %v211
    %289 = vmatprep.subr.mxu0 %v214
    %290 = vmatpush1.msra.mxu0 %v213
    %291 = vmatprep.subr.mxu0 %v216
    %292 = vmatpush1.msra.mxu0 %v215
    %293 = vmatprep.subr.mxu0 %v218
    %294 = vmatpush1.msra.mxu0 %v217
    %295 = vmatprep.subr.mxu0 %v220
    %296 = vmatpush1.msra.mxu0 %v219
    %297 = vmatprep.subr.mxu0 %v222
    %298 = vmatpush1.msra.mxu0 %v221
    %299 = vmatprep.subr.mxu0 %v224
    %300 = vmatpush1.msra.mxu0 %v223
    %301 = vmatprep.subr.mxu0 %v226
    %302 = vmatpush1.msra.mxu0 %v225
    %303 = vmatprep.subr.mxu0 %v228
    %304 = vmatpush1.msra.mxu0 %v227
    %305 = vmatprep.subr.mxu0 %v230
    %306 = vmatpush1.msra.mxu0 %v229
    %307 = vmatprep.subr.mxu0 %v232
    %308 = vmatpush1.msra.mxu0 %v231
    %309 = vmatprep.subr.mxu0 %v234
    %310 = vmatpush1.msra.mxu0 %v233
    %311 = vmatprep.subr.mxu0 %v236
    %312 = vmatpush1.msra.mxu0 %v235
    %313 = vmatprep.subr.mxu0 %v238
    %314 = vmatpush1.msra.mxu0 %v237
    %315 = vmatprep.subr.mxu0 %v240
    %316 = vmatpush1.msra.mxu0 %v239
    %317 = vmatprep.subr.mxu0 %v242
    %318 = vmatpush1.msra.mxu0 %v241
    %319 = vmatprep.subr.mxu0 %v244
    %320 = vmatpush1.msra.mxu0 %v243
    %321 = vmatprep.subr.mxu0 %v246
    %322 = vmatpush1.msra.mxu0 %v245
    %323 = vmatprep.subr.mxu0 %v248
    %324 = vmatpush1.msra.mxu0 %v247
    %325 = vmatprep.subr.mxu0 %v250
    %326 = vmatpush1.msra.mxu0 %v249
    %327 = vmatprep.subr.mxu0 %v252
    %328 = vmatpush1.msra.mxu0 %v251
    %329 = vmatprep.subr.mxu0 %v254
    %330 = vmatpush1.msra.mxu0 %v253
    %331 = vmatprep.subr.mxu0 %v256
    %332 = vmatpush1.msra.mxu0 %v255
    %333 = vmatprep.subr.mxu0 %v258
    %334 = vmatpush1.msra.mxu0 %v257
    %335 = vmatprep.subr.mxu0 %v260
    %336 = vmatpush1.msra.mxu0 %v259
    %337 = vmatprep.subr.mxu0 %v262
    %338 = vmatpush1.msra.mxu0 %v261
    %339 = vmatprep.subr.mxu0 %v264
    %340 = vmatpush1.msra.mxu0 %v263
    %341 = vmatprep.subr.mxu0 %v266
    %342 = vmatpush1.msra.mxu0 %v265
    %343 = vmatprep.subr.mxu0 %v268
    %344 = vmatpush1.msra.mxu0 %v267
    %345 = vmatprep.subr.mxu0 %v270
    %346 = vmatpush1.msra.mxu0 %v269
    %347 = vmatprep.mubr.f32.mxu0 %v204
    %348 = vmatmul.mubr.f32.gmra.mrb[0].mxu0 %v203
    %v349 = vpop.f32.mrb[0].mxu0
    %v350 = vadd.f32 %v276, %v349
    %v351 = vpop.f32.mrb[0].mxu0
    %v352 = vadd.f32 %v280, %v351
    %353 = vmatprep.mubr.f32.mxu0 %v206
    %354 = vmatmul.mubr.f32.gmra.mrb[0].mxu0 %v205
    %v355 = vpop.f32.mrb[0].mxu0
    %v356 = vadd.f32 %v276, %v355
    %v357 = vpop.f32.mrb[0].mxu0
    %v358 = vadd.f32 %v280, %v357
    %359 = vdwg.mxu0
    %v360 = vmul.f32 %v350, %v350
    %v361 = vmul.f32 %v352, %v352
    %v362 = vmul.f32 %v356, %v356
    %v363 = vmul.f32 %v358, %v358
    %v364 = vmul.f32 %v360, 0.044715
    %v365 = vmul.f32 %v361, 0.044715
    %v366 = vmul.f32 %v362, 0.044715
    %v367 = vmul.f32 %v363, 0.044715
    %v368 = vmul.f32 %v364, %v350
    %v369 = vmul.f32 %v365, %v352
    %v370 = vmul.f32 %v366, %v356
    %v371 = vmul.f32 %v367, %v358
    %v372 = vadd.f32 %v350, %v368
    %v373 = vadd.f32 %v352, %v369
    %v374 = vadd.f32 %v356, %v370
    %v375 = vadd.f32 %v358, %v371
    %v376 = vmul.f32 %v372, 0.7978846
    %v377 = vmul.f32 %v373, 0.7978846
    %v378 = vmul.f32 %v374, 0.7978846
    %v379 = vmul.f32 %v375, 0.7978846
    %v380 = vmul.f32 %v350, 0.5
    %v381 = vmul.f32 %v352, 0.5
    %v382 = vmul.f32 %v356, 0.5
    %v383 = vmul.f32 %v358, 0.5
    %v384 = vtanh.pop %v376
    %v385 = vtanh.pop %v377
    %v386 = vtanh.pop %v378
    %v387 = vtanh.pop %v379
    %v388 = vadd.f32 %v384, 1.0
    %v389 = vadd.f32 %v385, 1.0
    %v390 = vadd.f32 %v386, 1.0
    %v391 = vadd.f32 %v387, 1.0
    %v392 = vmul.f32 %v380, %v388
    %v393 = vmul.f32 %v381, %v389
    %v394 = vmul.f32 %v382, %v390
    %v395 = vmul.f32 %v383, %v391
    %v396 = vld [vmem:[#allocation5] sm:$0xff]
    %v397 = vld [vmem:[#allocation5 + $0x8] sm:$0xff]
    %v398 = vld [vmem:[#allocation5 + $0x10] sm:$0xff]
    %v399 = vld [vmem:[#allocation5 + $0x18] sm:$0xff]
    %v400 = vld [vmem:[#allocation5 + $0x20] sm:$0xff]
    %v401 = vld [vmem:[#allocation5 + $0x28] sm:$0xff]
    %v402 = vld [vmem:[#allocation5 + $0x30] sm:$0xff]
    %v403 = vld [vmem:[#allocation5 + $0x38] sm:$0xff]
    %v404 = vld [vmem:[#allocation5 + $0x40] sm:$0xff]
    %v405 = vld [vmem:[#allocation5 + $0x48] sm:$0xff]
    %v406 = vld [vmem:[#allocation5 + $0x50] sm:$0xff]
    %v407 = vld [vmem:[#allocation5 + $0x58] sm:$0xff]
    %v408 = vld [vmem:[#allocation5 + $0x60] sm:$0xff]
    %v409 = vld [vmem:[#allocation5 + $0x68] sm:$0xff]
    %v410 = vld [vmem:[#allocation5 + $0x70] sm:$0xff]
    %v411 = vld [vmem:[#allocation5 + $0x78] sm:$0xff]
    %v412 = vld [vmem:[#allocation5 + $0x80] sm:$0xff]
    %v413 = vld [vmem:[#allocation5 + $0x88] sm:$0xff]
    %v414 = vld [vmem:[#allocation5 + $0x90] sm:$0xff]
    %v415 = vld [vmem:[#allocation5 + $0x98] sm:$0xff]
    %v416 = vld [vmem:[#allocation5 + $0xa0] sm:$0xff]
    %v417 = vld [vmem:[#allocation5 + $0xa8] sm:$0xff]
    %v418 = vld [vmem:[#allocation5 + $0xb0] sm:$0xff]
    %v419 = vld [vmem:[#allocation5 + $0xb8] sm:$0xff]
    %v420 = vld [vmem:[#allocation5 + $0xc0] sm:$0xff]
    %v421 = vld [vmem:[#allocation5 + $0xc8] sm:$0xff]
    %v422 = vld [vmem:[#allocation5 + $0xd0] sm:$0xff]
    %v423 = vld [vmem:[#allocation5 + $0xd8] sm:$0xff]
    %v424 = vld [vmem:[#allocation5 + $0xe0] sm:$0xff]
    %v425 = vld [vmem:[#allocation5 + $0xe8] sm:$0xff]
    %v426 = vld [vmem:[#allocation5 + $0xf0] sm:$0xff]
    %v427 = vld [vmem:[#allocation5 + $0xf8] sm:$0xff]
    %v428 = vld [vmem:[#allocation5 + $0x100] sm:$0xff]
    %v429 = vld [vmem:[#allocation5 + $0x108] sm:$0xff]
    %v430 = vld [vmem:[#allocation5 + $0x110] sm:$0xff]
    %v431 = vld [vmem:[#allocation5 + $0x118] sm:$0xff]
    %v432 = vld [vmem:[#allocation5 + $0x120] sm:$0xff]
    %v433 = vld [vmem:[#allocation5 + $0x128] sm:$0xff]
    %v434 = vld [vmem:[#allocation5 + $0x130] sm:$0xff]
    %v435 = vld [vmem:[#allocation5 + $0x138] sm:$0xff]
    %v436 = vld [vmem:[#allocation5 + $0x140] sm:$0xff]
    %v437 = vld [vmem:[#allocation5 + $0x148] sm:$0xff]
    %v438 = vld [vmem:[#allocation5 + $0x150] sm:$0xff]
    %v439 = vld [vmem:[#allocation5 + $0x158] sm:$0xff]
    %v440 = vld [vmem:[#allocation5 + $0x160] sm:$0xff]
    %v441 = vld [vmem:[#allocation5 + $0x168] sm:$0xff]
    %v442 = vld [vmem:[#allocation5 + $0x170] sm:$0xff]
    %v443 = vld [vmem:[#allocation5 + $0x178] sm:$0xff]
    %v444 = vld [vmem:[#allocation5 + $0x180] sm:$0xff]
    %v445 = vld [vmem:[#allocation5 + $0x188] sm:$0xff]
    %v446 = vld [vmem:[#allocation5 + $0x190] sm:$0xff]
    %v447 = vld [vmem:[#allocation5 + $0x198] sm:$0xff]
    %v448 = vld [vmem:[#allocation5 + $0x1a0] sm:$0xff]
    %v449 = vld [vmem:[#allocation5 + $0x1a8] sm:$0xff]
    %v450 = vld [vmem:[#allocation5 + $0x1b0] sm:$0xff]
    %v451 = vld [vmem:[#allocation5 + $0x1b8] sm:$0xff]
    %v452 = vld [vmem:[#allocation5 + $0x1c0] sm:$0xff]
    %v453 = vld [vmem:[#allocation5 + $0x1c8] sm:$0xff]
    %v454 = vld [vmem:[#allocation5 + $0x1d0] sm:$0xff]
    %v455 = vld [vmem:[#allocation5 + $0x1d8] sm:$0xff]
    %v456 = vld [vmem:[#allocation5 + $0x1e0] sm:$0xff]
    %v457 = vld [vmem:[#allocation5 + $0x1e8] sm:$0xff]
    %v458 = vld [vmem:[#allocation5 + $0x1f0] sm:$0xff]
    %v459 = vld [vmem:[#allocation5 + $0x1f8] sm:$0xff]
    %v460 = vld [vmem:[%s6] sm:$0x3]
    %v462 = vlaneseq
    %v463 = vshrl.u32 %v462, 7
    %v464 = vsub.s32 0, %v463
    %v465 = vrot.slane %v460, %v464
    %v466 = vlaneseq
    %v467 = vshrl.u32 %v466, 7
    %v468 = vsub.s32 1, %v467
    %v469 = vrot.slane %v460, %v468
    %472 = vmatprep.subr.mxu0 %v397
    %473 = vmatpush1.msra.mxu0 %v396
    %474 = vmatprep.subr.mxu0 %v399
    %475 = vmatpush1.msra.mxu0 %v398
    %476 = vmatprep.subr.mxu0 %v401
    %477 = vmatpush1.msra.mxu0 %v400
    %478 = vmatprep.subr.mxu0 %v403
    %479 = vmatpush1.msra.mxu0 %v402
    %480 = vmatprep.subr.mxu0 %v405
    %481 = vmatpush1.msra.mxu0 %v404
    %482 = vmatprep.subr.mxu0 %v407
    %483 = vmatpush1.msra.mxu0 %v406
    %484 = vmatprep.subr.mxu0 %v409
    %485 = vmatpush1.msra.mxu0 %v408
    %486 = vmatprep.subr.mxu0 %v411
    %487 = vmatpush1.msra.mxu0 %v410
    %488 = vmatprep.subr.mxu0 %v413
    %489 = vmatpush1.msra.mxu0 %v412
    %490 = vmatprep.subr.mxu0 %v415
    %491 = vmatpush1.msra.mxu0 %v414
    %492 = vmatprep.subr.mxu0 %v417
    %493 = vmatpush1.msra.mxu0 %v416
    %494 = vmatprep.subr.mxu0 %v419
    %495 = vmatpush1.msra.mxu0 %v418
    %496 = vmatprep.subr.mxu0 %v421
    %497 = vmatpush1.msra.mxu0 %v420
    %498 = vmatprep.subr.mxu0 %v423
    %499 = vmatpush1.msra.mxu0 %v422
    %500 = vmatprep.subr.mxu0 %v425
    %501 = vmatpush1.msra.mxu0 %v424
    %502 = vmatprep.subr.mxu0 %v427
    %503 = vmatpush1.msra.mxu0 %v426
    %504 = vmatprep.subr.mxu0 %v429
    %505 = vmatpush1.msra.mxu0 %v428
    %506 = vmatprep.subr.mxu0 %v431
    %507 = vmatpush1.msra.mxu0 %v430
    %508 = vmatprep.subr.mxu0 %v433
    %509 = vmatpush1.msra.mxu0 %v432
    %510 = vmatprep.subr.mxu0 %v435
    %511 = vmatpush1.msra.mxu0 %v434
    %512 = vmatprep.subr.mxu0 %v437
    %513 = vmatpush1.msra.mxu0 %v436
    %514 = vmatprep.subr.mxu0 %v439
    %515 = vmatpush1.msra.mxu0 %v438
    %516 = vmatprep.subr.mxu0 %v441
    %517 = vmatpush1.msra.mxu0 %v440
    %518 = vmatprep.subr.mxu0 %v443
    %519 = vmatpush1.msra.mxu0 %v442
    %520 = vmatprep.subr.mxu0 %v445
    %521 = vmatpush1.msra.mxu0 %v444
    %522 = vmatprep.subr.mxu0 %v447
    %523 = vmatpush1.msra.mxu0 %v446
    %524 = vmatprep.subr.mxu0 %v449
    %525 = vmatpush1.msra.mxu0 %v448
    %526 = vmatprep.subr.mxu0 %v451
    %527 = vmatpush1.msra.mxu0 %v450
    %528 = vmatprep.subr.mxu0 %v453
    %529 = vmatpush1.msra.mxu0 %v452
    %530 = vmatprep.subr.mxu0 %v455
    %531 = vmatpush1.msra.mxu0 %v454
    %532 = vmatprep.subr.mxu0 %v457
    %533 = vmatpush1.msra.mxu0 %v456
    %534 = vmatprep.subr.mxu0 %v459
    %535 = vmatpush1.msra.mxu0 %v458
    %536 = vmatprep.mubr.f32.mxu0 %v393
    %537 = vmatmul.mubr.f32.gmra.mrb[0].mxu0 %v392
    %v538 = vpop.f32.mrb[0].mxu0
    %v539 = vadd.f32 %v465, %v538
    %v540 = vpop.f32.mrb[0].mxu0
    %v541 = vadd.f32 %v469, %v540
    %542 = vmatprep.mubr.f32.mxu0 %v395
    %543 = vmatmul.mubr.f32.gmra.mrb[0].mxu0 %v394
    %v544 = vpop.f32.mrb[0].mxu0
    %v545 = vadd.f32 %v465, %v544
    %v546 = vpop.f32.mrb[0].mxu0
    %v547 = vadd.f32 %v469, %v546
    %548 = vdwg.mxu0
    %v549 = vmul.f32 %v539, %v539
    %v550 = vmul.f32 %v541, %v541
    %v551 = vmul.f32 %v545, %v545
    %v552 = vmul.f32 %v547, %v547
    %v553 = vmul.f32 %v549, 0.044715
    %v554 = vmul.f32 %v550, 0.044715
    %v555 = vmul.f32 %v551, 0.044715
    %v556 = vmul.f32 %v552, 0.044715
    %v557 = vmul.f32 %v553, %v539
    %v558 = vmul.f32 %v554, %v541
    %v559 = vmul.f32 %v555, %v545
    %v560 = vmul.f32 %v556, %v547
    %v561 = vadd.f32 %v539, %v557
    %v562 = vadd.f32 %v541, %v558
    %v563 = vadd.f32 %v545, %v559
    %v564 = vadd.f32 %v547, %v560
    %v565 = vmul.f32 %v561, 0.7978846
    %v566 = vmul.f32 %v562, 0.7978846
    %v567 = vmul.f32 %v563, 0.7978846
    %v568 = vmul.f32 %v564, 0.7978846
    %v569 = vmul.f32 %v539, 0.5
    %v570 = vmul.f32 %v541, 0.5
    %v571 = vmul.f32 %v545, 0.5
    %v572 = vmul.f32 %v547, 0.5
    %v573 = vtanh.pop %v565
    %v574 = vtanh.pop %v566
    %v575 = vtanh.pop %v567
    %v576 = vtanh.pop %v568
    %v577 = vadd.f32 %v573, 1.0
    %v578 = vadd.f32 %v574, 1.0
    %v579 = vadd.f32 %v575, 1.0
    %v580 = vadd.f32 %v576, 1.0
    %v581 = vmul.f32 %v569, %v577
    %v582 = vmul.f32 %v570, %v578
    %v583 = vmul.f32 %v571, %v579
    %v584 = vmul.f32 %v572, %v580
    %v585 = vld [vmem:[#allocation7] sm:$0xff]
    %v586 = vld [vmem:[#allocation7 + $0x8] sm:$0xff]
    %v587 = vld [vmem:[#allocation7 + $0x10] sm:$0xff]
    %v588 = vld [vmem:[#allocation7 + $0x18] sm:$0xff]
    %v589 = vld [vmem:[#allocation7 + $0x20] sm:$0xff]
    %v590 = vld [vmem:[#allocation7 + $0x28] sm:$0xff]
    %v591 = vld [vmem:[#allocation7 + $0x30] sm:$0xff]
    %v592 = vld [vmem:[#allocation7 + $0x38] sm:$0xff]
    %v593 = vld [vmem:[#allocation7 + $0x40] sm:$0xff]
    %v594 = vld [vmem:[#allocation7 + $0x48] sm:$0xff]
    %v595 = vld [vmem:[#allocation7 + $0x50] sm:$0xff]
    %v596 = vld [vmem:[#allocation7 + $0x58] sm:$0xff]
    %v597 = vld [vmem:[#allocation7 + $0x60] sm:$0xff]
    %v598 = vld [vmem:[#allocation7 + $0x68] sm:$0xff]
    %v599 = vld [vmem:[#allocation7 + $0x70] sm:$0xff]
    %v600 = vld [vmem:[#allocation7 + $0x78] sm:$0xff]
    %v601 = vld [vmem:[#allocation7 + $0x80] sm:$0xff]
    %v602 = vld [vmem:[#allocation7 + $0x88] sm:$0xff]
    %v603 = vld [vmem:[#allocation7 + $0x90] sm:$0xff]
    %v604 = vld [vmem:[#allocation7 + $0x98] sm:$0xff]
    %v605 = vld [vmem:[#allocation7 + $0xa0] sm:$0xff]
    %v606 = vld [vmem:[#allocation7 + $0xa8] sm:$0xff]
    %v607 = vld [vmem:[#allocation7 + $0xb0] sm:$0xff]
    %v608 = vld [vmem:[#allocation7 + $0xb8] sm:$0xff]
    %v609 = vld [vmem:[#allocation7 + $0xc0] sm:$0xff]
    %v610 = vld [vmem:[#allocation7 + $0xc8] sm:$0xff]
    %v611 = vld [vmem:[#allocation7 + $0xd0] sm:$0xff]
    %v612 = vld [vmem:[#allocation7 + $0xd8] sm:$0xff]
    %v613 = vld [vmem:[#allocation7 + $0xe0] sm:$0xff]
    %v614 = vld [vmem:[#allocation7 + $0xe8] sm:$0xff]
    %v615 = vld [vmem:[#allocation7 + $0xf0] sm:$0xff]
    %v616 = vld [vmem:[#allocation7 + $0xf8] sm:$0xff]
    %617 = vmatprep.subr.mxu0 0.0
    %618 = vmatpush1.msra.mxu0 %v585
    %619 = vmatprep.subr.mxu0 0.0
    %620 = vmatpush1.msra.mxu0 %v586
    %621 = vmatprep.subr.mxu0 0.0
    %622 = vmatpush1.msra.mxu0 %v587
    %623 = vmatprep.subr.mxu0 0.0
    %624 = vmatpush1.msra.mxu0 %v588
    %625 = vmatprep.subr.mxu0 0.0
    %626 = vmatpush1.msra.mxu0 %v589
    %627 = vmatprep.subr.mxu0 0.0
    %628 = vmatpush1.msra.mxu0 %v590
    %629 = vmatprep.subr.mxu0 0.0
    %630 = vmatpush1.msra.mxu0 %v591
    %631 = vmatprep.subr.mxu0 0.0
    %632 = vmatpush1.msra.mxu0 %v592
    %633 = vmatprep.subr.mxu0 0.0
    %634 = vmatpush1.msra.mxu0 %v593
    %635 = vmatprep.subr.mxu0 0.0
    %636 = vmatpush1.msra.mxu0 %v594
    %637 = vmatprep.subr.mxu0 0.0
    %638 = vmatpush1.msra.mxu0 %v595
    %639 = vmatprep.subr.mxu0 0.0
    %640 = vmatpush1.msra.mxu0 %v596
    %641 = vmatprep.subr.mxu0 0.0
    %642 = vmatpush1.msra.mxu0 %v597
    %643 = vmatprep.subr.mxu0 0.0
    %644 = vmatpush1.msra.mxu0 %v598
    %645 = vmatprep.subr.mxu0 0.0
    %646 = vmatpush1.msra.mxu0 %v599
    %647 = vmatprep.subr.mxu0 0.0
    %648 = vmatpush1.msra.mxu0 %v600
    %649 = vmatprep.subr.mxu0 0.0
    %650 = vmatpush1.msra.mxu0 %v601
    %651 = vmatprep.subr.mxu0 0.0
    %652 = vmatpush1.msra.mxu0 %v602
    %653 = vmatprep.subr.mxu0 0.0
    %654 = vmatpush1.msra.mxu0 %v603
    %655 = vmatprep.subr.mxu0 0.0
    %656 = vmatpush1.msra.mxu0 %v604
    %657 = vmatprep.subr.mxu0 0.0
    %658 = vmatpush1.msra.mxu0 %v605
    %659 = vmatprep.subr.mxu0 0.0
    %660 = vmatpush1.msra.mxu0 %v606
    %661 = vmatprep.subr.mxu0 0.0
    %662 = vmatpush1.msra.mxu0 %v607
    %663 = vmatprep.subr.mxu0 0.0
    %664 = vmatpush1.msra.mxu0 %v608
    %665 = vmatprep.subr.mxu0 0.0
    %666 = vmatpush1.msra.mxu0 %v609
    %667 = vmatprep.subr.mxu0 0.0
    %668 = vmatpush1.msra.mxu0 %v610
    %669 = vmatprep.subr.mxu0 0.0
    %670 = vmatpush1.msra.mxu0 %v611
    %671 = vmatprep.subr.mxu0 0.0
    %672 = vmatpush1.msra.mxu0 %v612
    %673 = vmatprep.subr.mxu0 0.0
    %674 = vmatpush1.msra.mxu0 %v613
    %675 = vmatprep.subr.mxu0 0.0
    %676 = vmatpush1.msra.mxu0 %v614
    %677 = vmatprep.subr.mxu0 0.0
    %678 = vmatpush1.msra.mxu0 %v615
    %679 = vmatprep.subr.mxu0 0.0
    %680 = vmatpush1.msra.mxu0 %v616
    %681 = vmatprep.mubr.f32.mxu0 %v582
    %682 = vmatmul.mubr.f32.gmra.mrb[0].mxu0 %v581
    %v683 = vpop.f32.mrb[0].mxu0
    %v684 = vadd.f32 0.0, %v683
    %v685 = vpop.f32.mrb[0].mxu0
    %686 = vmatprep.mubr.f32.mxu0 %v584
    %687 = vmatmul.mubr.f32.gmra.mrb[0].mxu0 %v583
    %v688 = vpop.f32.mrb[0].mxu0
    %v689 = vadd.f32 0.0, %v688
    %v690 = vpop.f32.mrb[0].mxu0
    %691 = vdwg.mxu0
    %692 = vst [vmem:[#allocation8] sm:$0xff] %v684
    %693 = vst [vmem:[#allocation8 + $0x8] sm:$0xff] %v689
    // Predicated region
    $region46: #{tpu_custom_call.1} parent=1 // pred_check
      _
    $region47: #{tpu_custom_call.1} parent=1 // pred_check_branch
      %695 = sbr.rel (0) target = $region49
    $region48: #{tpu_custom_call.1} parent=1 // pred_region
      %s697 = ssub.s32 256, 256
      %698 = vsyncadd [#allocation4], %s697
      %s699 = sshll.u32 [#allocation8], 4
      %s700 = int_to_ptr.vmem [resolvable:$true] %s699
      %705 = dma.vmem_to_hbm [thread:$0]  %s700, 256, %s8, [#allocation4], 128, 128, 8
    $region49: #{tpu_custom_call.1} parent=1 // pred_fallthru
      _
    // Predicated region
    $region50: #{tpu_custom_call.1} parent=1 // pred_check
      _
    $region51: #{tpu_custom_call.1} parent=1 // pred_check_branch
      %707 = sbr.rel (0) target = $region53
    $region52: #{tpu_custom_call.1} parent=1 // pred_region
      %708 = dma.done [#allocation4], 256
    $region53: #{tpu_custom_call.1} parent=1 // pred_fallthru
      _
    %709 = vsyncpa [#allocation3], 1
    %710 = vsyncpa [#allocation6], 1
    %711 = vsyncpa [#allocation4], 1

</llo_original>
